<compile_context>
chip_gen: v6e
topology: v6e:2x2x1
jax: 0.10.0
libtpu: 0.0.40
codegen_flags: <defaults>
</compile_context>

<pallas_src>
import functools

import jax
import jax.numpy as jnp
from jax.experimental import pallas as pl
from jax.experimental.pallas import tpu as pltpu

_LN_EPS = 1e-6


# ------------- fused kernel: LayerNorm -> FFN (K-blocked over d_ff) -> residual -------------

def _sublayer_connection_ffn_kernel(x_ref, g_ref, beta_ref, w1_ref, b1_ref,
                                    w2_ref, b2_ref, o_ref, acc_ref, xn_ref):
    """Grid = (row_tiles, dff_chunks).

    acc_ref: [tm, D] f32 accumulator for the FFN output.
    xn_ref : [tm, D] bf16 normalized activations (computed once per row tile
             at chunk 0, reused for every d_ff chunk -> feeds the MXU).
    """
    j = pl.program_id(1)
    nj = pl.num_programs(1)

    @pl.when(j == 0)
    def _():
        # LayerNorm with f32 statistics.  torch `x.std(-1)` is the *unbiased*
        # estimator (divides by D-1) and eps is added to std, not variance.
        x = x_ref[...].astype(jnp.float32)
        d = x.shape[-1]
        mean = jnp.mean(x, axis=-1, keepdims=True)
        diff = x - mean
        var = jnp.sum(diff * diff, axis=-1, keepdims=True) * (1.0 / (d - 1))
        # Per-row reciprocal on the EUP (approx) instead of D divides per row.
        inv = pl.reciprocal(jnp.sqrt(var) + _LN_EPS, approx=True)
        xn = g_ref[...] * (diff * inv) + beta_ref[...]
        xn_ref[...] = xn.astype(xn_ref.dtype)
        acc_ref[...] = jnp.zeros_like(acc_ref)

    # One d_ff chunk: relu(xn @ w1[:, chunk] + b1[chunk]) @ w2[chunk, :]
    # bf16 at the MXU boundary, f32 accumulation; elementwise chain stays f32
    # (safe on v5e, which has no bf16 VPU).
    h = jnp.dot(xn_ref[...], w1_ref[...], preferred_element_type=jnp.float32)
    h = jnp.maximum(h + b1_ref[...], 0.0)
    acc_ref[...] += jnp.dot(h.astype(jnp.bfloat16), w2_ref[...],
                            preferred_element_type=jnp.float32)

    @pl.when(j == nj - 1)
    def _():
        # Residual add in f32; b2 added once at the end.  Output tile aliases
        # the input tile in HBM (x is donated into the jit).
        out = x_ref[...].astype(jnp.float32) + acc_ref[...] + b2_ref[...]
        o_ref[...] = out.astype(o_ref.dtype)


# ------------------------------- tile selection ---------------------------------

def _pick_row_tile(rows, itemsize):
    """rows <= 512: one full-extent block (block == full dim is always legal).
    Otherwise MXU-aligned tiles capped at 256 (v7x VMEM / megacore friendly,
    still a multiple of 128 for v5e's MXU)."""
    if rows <= 512:
        return rows
    sub = 16 if itemsize == 2 else 8          # bf16 sublane packing needs 16
    for tm in (256, 128, 64, 32, 16, 8):
        if tm % sub == 0 and rows % tm == 0:
            return tm
    # TODO(synk): pad ragged row counts instead of one giant fallback block.
    return rows


def _pick_ff_tile(dff, ff_block):
    """Largest multiple of 128 <= min(dff, ff_block) that divides dff."""
    tff = (min(dff, ff_block) // 128) * 128
    while tff >= 128:
        if dff % tff == 0:
            return tff
        tff -= 128
    return dff


# ---------------------------------- wrapper -------------------------------------

def make_sublayer_connection_ffn(ff_block=512):
    """Returns fwd(x, gamma, beta, w1, b1, w2, b2) = x + FFN(LayerNorm(x)),
    fused into a single Pallas kernel with d_ff blocked into `ff_block`-wide
    chunks.  x is donated (residual updated in place)."""

    @functools.partial(jax.jit, donate_argnums=0)
    def fwd(x, gamma, beta, w1, b1, w2, b2):
        orig_shape = x.shape
        D = orig_shape[-1]
        DFF = w1.shape[-1]
        x2d = x.reshape(-1, D)                 # residual stream stays in caller's dtype
        rows = x2d.shape[0]
        bpe_x = jnp.dtype(x.dtype).itemsize

        tm = _pick_row_tile(rows, bpe_x)
        tff = _pick_ff_tile(DFF, ff_block)
        grid = (rows // tm, DFF // tff)

        g2d = gamma.reshape(1, D).astype(jnp.float32)
        be2d = beta.reshape(1, D).astype(jnp.float32)
        b1r = b1.reshape(1, DFF).astype(jnp.float32)
        b2r = b2.reshape(1, D).astype(jnp.float32)
        w1b = w1.astype(jnp.bfloat16)
        w2b = w2.astype(jnp.bfloat16)

        # Explicit VMEM budget: double-buffered pipelined blocks + scratch,
        # with headroom, capped at 64 MiB (v7x per-TC physical VMEM).
        needed = (
            4 * tm * D * bpe_x                  # x + out blocks, double-buffered
            + 2 * 2 * (D * tff + tff * D)       # w1/w2 bf16 chunks, double-buffered
            + 2 * (3 * D + tff) * 4             # gamma/beta/b2 + b1 chunk (f32)
            + tm * D * 4 + tm * D * 2           # f32 accumulator + bf16 xn scratch
        )
        vmem_limit = min(int(needed * 1.5) + (4 << 20), 64 << 20)

        row_spec = pl.BlockSpec((tm, D), lambda i, j: (i, 0))

        out = pl.pallas_call(
            _sublayer_connection_ffn_kernel,
            out_shape=jax.ShapeDtypeStruct((rows, D), x.dtype),
            grid=grid,
            in_specs=[
                row_spec,                                      # x (residual stream)
                pl.BlockSpec((1, D), lambda i, j: (0, 0)),     # gamma
                pl.BlockSpec((1, D), lambda i, j: (0, 0)),     # beta
                pl.BlockSpec((D, tff), lambda i, j: (0, j)),   # w1 chunk
                pl.BlockSpec((1, tff), lambda i, j: (0, j)),   # b1 chunk
                pl.BlockSpec((tff, D), lambda i, j: (j, 0)),   # w2 chunk
                pl.BlockSpec((1, D), lambda i, j: (0, 0)),     # b2
            ],
            out_specs=row_spec,
            scratch_shapes=[
                pltpu.VMEM((tm, D), jnp.float32),   # FFN-output accumulator
                pltpu.VMEM((tm, D), jnp.bfloat16),  # normalized activations
            ],
            input_output_aliases={0: 0},            # in-place residual update
            compiler_params=pltpu.CompilerParams(
                dimension_semantics=("parallel", "arbitrary"),
                vmem_limit_bytes=vmem_limit),
            cost_estimate=pl.CostEstimate(
                flops=4 * rows * D * DFF,
                transcendentals=2 * rows,
                bytes_accessed=(2 * rows * D * bpe_x          # residual in + out
                                + 2 * D * DFF * 2             # bf16 weights
                                + (2 * D + DFF + D) * 4)),    # gamma/beta/biases
        )(x2d, g2d, be2d, w1b, b1r, w2b, b2r)
        return out.reshape(orig_shape)

    return fwd


# ----------------------------------- demo ---------------------------------------

if __name__ == "__main__":
    # Lane-dense model dims at small batch/seq.  ff_block=256 with DFF=512
    # exercises the d_ff-chunked accumulation path (2 chunks).
    B, S, D, DFF = 2, 8, 128, 512

    key = jax.random.PRNGKey(0)
    k_x, k_w1, k_b1, k_w2, k_b2 = jax.random.split(key, 5)

    x = jax.random.normal(k_x, (B, S, D), dtype=jnp.float32)
    gamma = jnp.ones((D,), jnp.float32)
    beta = jnp.zeros((D,), jnp.float32)

    # PyTorch-Linear-style init; weights stored bf16 (MXU inputs), biases f32.
    bound1 = 1.0 / D ** 0.5
    bound2 = 1.0 / DFF ** 0.5
    w1 = jax.random.uniform(k_w1, (D, DFF), jnp.float32, -bound1, bound1).astype(jnp.bfloat16)
    b1 = jax.random.uniform(k_b1, (1, DFF), jnp.float32, -bound1, bound1)
    w2 = jax.random.uniform(k_w2, (DFF, D), jnp.float32, -bound2, bound2).astype(jnp.bfloat16)
    b2 = jax.random.uniform(k_b2, (1, D), jnp.float32, -bound2, bound2)

    # Pure-JAX reference (f32 matmuls on the same bf16-rounded weights).
    # Computed BEFORE the kernel call because x is donated into the jit.
    def ref(xr):
        mean = xr.mean(-1, keepdims=True)
        std = jnp.std(xr, axis=-1, keepdims=True, ddof=1)
        xn = gamma * (xr - mean) / (std + _LN_EPS) + beta
        h = jnp.maximum(xn @ w1.astype(jnp.float32) + b1, 0.0)
        return xr + (h @ w2.astype(jnp.float32) + b2)

    expected = jax.block_until_ready(ref(x))

    sublayer_connection = make_sublayer_connection_ffn(ff_block=256)
    out = jax.block_until_ready(sublayer_connection(x, gamma, beta, w1, b1, w2, b2))

    assert out.shape == (B, S, D)
    max_err = float(jnp.max(jnp.abs(out - expected)))
    assert max_err < 0.1, f"max abs error {max_err}"
    print("KERNEL_OK")
</pallas_src>

<mosaic_0001>
module attributes {stable_mosaic.version = 11 : i64} {
  func.func @_sublayer_connection_ffn_kernel(%arg0: i32, %arg1: i32, %arg2: memref<16x128xf32, #tpu.memory_space<vmem>>, %arg3: memref<1x128xf32, #tpu.memory_space<vmem>>, %arg4: memref<1x128xf32, #tpu.memory_space<vmem>>, %arg5: memref<128x256xbf16, #tpu.memory_space<vmem>>, %arg6: memref<1x256xf32, #tpu.memory_space<vmem>>, %arg7: memref<256x128xbf16, #tpu.memory_space<vmem>>, %arg8: memref<1x128xf32, #tpu.memory_space<vmem>>, %arg9: memref<16x128xf32, #tpu.memory_space<vmem>>, %arg10: memref<16x128xf32, #tpu.memory_space<vmem>>, %arg11: memref<16x128xbf16, #tpu.memory_space<vmem>>) attributes {dimension_semantics = [#tpu.dimension_semantics<parallel>, #tpu.dimension_semantics<arbitrary>], iteration_bounds = array<i64: 1, 2>, scalar_prefetch = 0 : i64, scratch_operands = 2 : i64, tpu.core_type = #tpu.core_type<tc>, window_params = [{transform_indices = @transform_0, window_bounds = array<i64: 16, 128>}, {pipeline_mode = #tpu.pipeline_mode<synchronous>, transform_indices = @transform_1, window_bounds = array<i64: 1, 128>}, {pipeline_mode = #tpu.pipeline_mode<synchronous>, transform_indices = @transform_2, window_bounds = array<i64: 1, 128>}, {transform_indices = @transform_3, window_bounds = array<i64: 128, 256>}, {transform_indices = @transform_4, window_bounds = array<i64: 1, 256>}, {transform_indices = @transform_5, window_bounds = array<i64: 256, 128>}, {pipeline_mode = #tpu.pipeline_mode<synchronous>, transform_indices = @transform_6, window_bounds = array<i64: 1, 128>}, {transform_indices = @transform_7, window_bounds = array<i64: 16, 128>}]} {
    %c0_i32 = arith.constant 0 : i32
    %0 = arith.cmpi eq, %arg1, %c0_i32 : i32
    %1 = arith.extui %0 : i1 to i32
    %c0_i32_0 = arith.constant 0 : i32
    %2 = arith.cmpi ne, %1, %c0_i32_0 : i32
    scf.if %2 {
      %c0_15 = arith.constant 0 : index
      %c0_16 = arith.constant 0 : index
      %20 = vector.load %arg2[%c0_15, %c0_16] : memref<16x128xf32, #tpu.memory_space<vmem>>, vector<16x128xf32>
      %cst_17 = arith.constant dense<0.000000e+00> : vector<16xf32>
      %21 = vector.multi_reduction <add>, %20, %cst_17 [1] : vector<16x128xf32> to vector<16xf32>
      %22 = vector.shape_cast %21 : vector<16xf32> to vector<16x1xf32>
      %cst_18 = arith.constant 1.280000e+02 : f32
      %23 = vector.broadcast %cst_18 : f32 to vector<16x1xf32>
      %24 = arith.divf %22, %23 : vector<16x1xf32>
      %25 = vector.broadcast %24 : vector<16x1xf32> to vector<16x128xf32>
      %26 = arith.subf %20, %25 : vector<16x128xf32>
      %27 = arith.mulf %26, %26 : vector<16x128xf32>
      %cst_19 = arith.constant dense<0.000000e+00> : vector<16xf32>
      %28 = vector.multi_reduction <add>, %27, %cst_19 [1] : vector<16x128xf32> to vector<16xf32>
      %29 = vector.shape_cast %28 : vector<16xf32> to vector<16x1xf32>
      %cst_20 = arith.constant 0.00787401571 : f32
      %30 = vector.broadcast %cst_20 : f32 to vector<16x1xf32>
      %31 = arith.mulf %29, %30 : vector<16x1xf32>
      %32 = math.sqrt %31 : vector<16x1xf32>
      %cst_21 = arith.constant 9.99999997E-7 : f32
      %33 = vector.broadcast %cst_21 : f32 to vector<16x1xf32>
      %34 = arith.addf %32, %33 : vector<16x1xf32>
      %35 = tpu.reciprocal %34 {approx = true} : vector<16x1xf32> -> vector<16x1xf32>
      %c0_22 = arith.constant 0 : index
      %c0_23 = arith.constant 0 : index
      %36 = vector.load %arg3[%c0_22, %c0_23] : memref<1x128xf32, #tpu.memory_space<vmem>>, vector<1x128xf32>
      %37 = vector.broadcast %35 : vector<16x1xf32> to vector<16x128xf32>
      %38 = arith.mulf %26, %37 : vector<16x128xf32>
      %39 = vector.broadcast %36 : vector<1x128xf32> to vector<16x128xf32>
      %40 = arith.mulf %39, %38 : vector<16x128xf32>
      %c0_24 = arith.constant 0 : index
      %c0_25 = arith.constant 0 : index
      %41 = vector.load %arg4[%c0_24, %c0_25] : memref<1x128xf32, #tpu.memory_space<vmem>>, vector<1x128xf32>
      %42 = vector.broadcast %41 : vector<1x128xf32> to vector<16x128xf32>
      %43 = arith.addf %40, %42 : vector<16x128xf32>
      %44 = arith.truncf %43 : vector<16x128xf32> to vector<16x128xbf16>
      %c0_26 = arith.constant 0 : index
      %c0_27 = arith.constant 0 : index
      %45 = vector.load %arg11[%c0_26, %c0_27] : memref<16x128xbf16, #tpu.memory_space<vmem>>, vector<16x128xbf16>
      tpu.vector_store %arg11[%c0_26, %c0_27], %44 {strides = array<i32>} : memref<16x128xbf16, #tpu.memory_space<vmem>>, vector<16x128xbf16>,
      %cst_28 = arith.constant 0.000000e+00 : f32
      %46 = vector.broadcast %cst_28 : f32 to vector<16x128xf32>
      %c0_29 = arith.constant 0 : index
      %c0_30 = arith.constant 0 : index
      %47 = vector.load %arg10[%c0_29, %c0_30] : memref<16x128xf32, #tpu.memory_space<vmem>>, vector<16x128xf32>
      tpu.vector_store %arg10[%c0_29, %c0_30], %46 {strides = array<i32>} : memref<16x128xf32, #tpu.memory_space<vmem>>, vector<16x128xf32>,
    } else {
    }
    %c0 = arith.constant 0 : index
    %c0_1 = arith.constant 0 : index
    %3 = vector.load %arg11[%c0, %c0_1] : memref<16x128xbf16, #tpu.memory_space<vmem>>, vector<16x128xbf16>
    %c0_2 = arith.constant 0 : index
    %c0_3 = arith.constant 0 : index
    %4 = vector.load %arg5[%c0_2, %c0_3] : memref<128x256xbf16, #tpu.memory_space<vmem>>, vector<128x256xbf16>
    %cst = arith.constant dense<0.000000e+00> : vector<16x256xf32>
    %5 = tpu.matmul %3, %4, %cst {dimension_numbers = #tpu.dot_dimension_numbers<[1], [0], [0], [1], [0, 0, 1, 1], [], []>} : vector<16x128xbf16>, vector<128x256xbf16>, vector<16x256xf32> -> vector<16x256xf32>
    %c0_4 = arith.constant 0 : index
    %c0_5 = arith.constant 0 : index
    %6 = vector.load %arg6[%c0_4, %c0_5] : memref<1x256xf32, #tpu.memory_space<vmem>>, vector<1x256xf32>
    %7 = vector.broadcast %6 : vector<1x256xf32> to vector<16x256xf32>
    %8 = arith.addf %5, %7 : vector<16x256xf32>
    %cst_6 = arith.constant 0.000000e+00 : f32
    %9 = vector.broadcast %cst_6 : f32 to vector<16x256xf32>
    %10 = arith.maximumf %8, %9 : vector<16x256xf32>
    %c0_7 = arith.constant 0 : index
    %c0_8 = arith.constant 0 : index
    %11 = vector.load %arg10[%c0_7, %c0_8] : memref<16x128xf32, #tpu.memory_space<vmem>>, vector<16x128xf32>
    %12 = arith.truncf %10 : vector<16x256xf32> to vector<16x256xbf16>
    %c0_9 = arith.constant 0 : index
    %c0_10 = arith.constant 0 : index
    %13 = vector.load %arg7[%c0_9, %c0_10] : memref<256x128xbf16, #tpu.memory_space<vmem>>, vector<256x128xbf16>
    %cst_11 = arith.constant dense<0.000000e+00> : vector<16x128xf32>
    %14 = tpu.matmul %12, %13, %cst_11 {dimension_numbers = #tpu.dot_dimension_numbers<[1], [0], [0], [1], [0, 0, 1, 1], [], []>} : vector<16x256xbf16>, vector<256x128xbf16>, vector<16x128xf32> -> vector<16x128xf32>
    %15 = arith.addf %11, %14 : vector<16x128xf32>
    %c0_12 = arith.constant 0 : index
    %c0_13 = arith.constant 0 : index
    %16 = vector.load %arg10[%c0_12, %c0_13] : memref<16x128xf32, #tpu.memory_space<vmem>>, vector<16x128xf32>
    tpu.vector_store %arg10[%c0_12, %c0_13], %15 {strides = array<i32>} : memref<16x128xf32, #tpu.memory_space<vmem>>, vector<16x128xf32>,
    %c1_i32 = arith.constant 1 : i32
    %17 = arith.cmpi eq, %arg1, %c1_i32 : i32
    %18 = arith.extui %17 : i1 to i32
    %c0_i32_14 = arith.constant 0 : i32
    %19 = arith.cmpi ne, %18, %c0_i32_14 : i32
    scf.if %19 {
      %c0_15 = arith.constant 0 : index
      %c0_16 = arith.constant 0 : index
      %20 = vector.load %arg2[%c0_15, %c0_16] : memref<16x128xf32, #tpu.memory_space<vmem>>, vector<16x128xf32>
      %c0_17 = arith.constant 0 : index
      %c0_18 = arith.constant 0 : index
      %21 = vector.load %arg10[%c0_17, %c0_18] : memref<16x128xf32, #tpu.memory_space<vmem>>, vector<16x128xf32>
      %22 = arith.addf %20, %21 : vector<16x128xf32>
      %c0_19 = arith.constant 0 : index
      %c0_20 = arith.constant 0 : index
      %23 = vector.load %arg8[%c0_19, %c0_20] : memref<1x128xf32, #tpu.memory_space<vmem>>, vector<1x128xf32>
      %24 = vector.broadcast %23 : vector<1x128xf32> to vector<16x128xf32>
      %25 = arith.addf %22, %24 : vector<16x128xf32>
      %c0_21 = arith.constant 0 : index
      %c0_22 = arith.constant 0 : index
      %26 = vector.load %arg9[%c0_21, %c0_22] : memref<16x128xf32, #tpu.memory_space<vmem>>, vector<16x128xf32>
      tpu.vector_store %arg9[%c0_21, %c0_22], %25 {strides = array<i32>} : memref<16x128xf32, #tpu.memory_space<vmem>>, vector<16x128xf32>,
    } else {
    }
    return
  }
  func.func @transform_0(%arg0: i32, %arg1: i32) -> (i32, i32) {
    %c0_i32 = arith.constant 0 : i32
    %c0_i32_0 = arith.constant 0 : i32
    return %arg0, %c0_i32 : i32, i32
  }
  func.func @transform_1(%arg0: i32, %arg1: i32) -> (i32, i32) {
    %c0_i32 = arith.constant 0 : i32
    %c0_i32_0 = arith.constant 0 : i32
    %c0_i32_1 = arith.constant 0 : i32
    return %c0_i32, %c0_i32_0 : i32, i32
  }
  func.func @transform_2(%arg0: i32, %arg1: i32) -> (i32, i32) {
    %c0_i32 = arith.constant 0 : i32
    %c0_i32_0 = arith.constant 0 : i32
    %c0_i32_1 = arith.constant 0 : i32
    return %c0_i32, %c0_i32_0 : i32, i32
  }
  func.func @transform_3(%arg0: i32, %arg1: i32) -> (i32, i32) {
    %c0_i32 = arith.constant 0 : i32
    %c0_i32_0 = arith.constant 0 : i32
    return %c0_i32, %arg1 : i32, i32
  }
  func.func @transform_4(%arg0: i32, %arg1: i32) -> (i32, i32) {
    %c0_i32 = arith.constant 0 : i32
    %c0_i32_0 = arith.constant 0 : i32
    return %c0_i32, %arg1 : i32, i32
  }
  func.func @transform_5(%arg0: i32, %arg1: i32) -> (i32, i32) {
    %c0_i32 = arith.constant 0 : i32
    %c0_i32_0 = arith.constant 0 : i32
    return %arg1, %c0_i32 : i32, i32
  }
  func.func @transform_6(%arg0: i32, %arg1: i32) -> (i32, i32) {
    %c0_i32 = arith.constant 0 : i32
    %c0_i32_0 = arith.constant 0 : i32
    %c0_i32_1 = arith.constant 0 : i32
    return %c0_i32, %c0_i32_0 : i32, i32
  }
  func.func @transform_7(%arg0: i32, %arg1: i32) -> (i32, i32) {
    %c0_i32 = arith.constant 0 : i32
    %c0_i32_0 = arith.constant 0 : i32
    return %arg0, %c0_i32 : i32, i32
  }
}

</mosaic_0001>

<llo_original>
// kernel: fwd.1
$region0: #{fwd.1}
  #allocation0 [shape = 'u32[]', space=smem, size = 0x4, offset = 0x4, fixed_abs, tag = 'smem constant byte address 0x4 - core index']
  #allocation1 [shape = 'u32[144,128]{1,0:T(1,128)}', space=vmem, size = 0x12000, scoped, tag = 'internal scratch']
  #allocation2 [shape = 'f32[16,128]{1,0:T(8,128)}', space=vmem, size = 0x2000, scoped, tag = 'scratch operand']
  #allocation3 [shape = 'bf16[16,128]{1,0:T(8,128)(2,1)}', space=vmem, size = 0x1000, scoped, tag = 'scratch operand']
  %s0 = inlined_call_operand.hbm [shape: f32[16,128], index: 0, kind: input, shape index: {}, may-alias: {0,7}]
  %s1 = inlined_call_operand.vmem [shape: f32[1,128], index: 1, kind: input, shape index: {}]
  %s2 = inlined_call_operand.vmem [shape: f32[1,128], index: 2, kind: input, shape index: {}]
  %s3 = inlined_call_operand.hbm [shape: bf16[128,512], index: 3, kind: input, shape index: {}]
  %s4 = inlined_call_operand.vmem [shape: f32[1,512], index: 4, kind: input, shape index: {}]
  %s5 = inlined_call_operand.hbm [shape: bf16[512,128], index: 5, kind: input, shape index: {}]
  %s6 = inlined_call_operand.vmem [shape: f32[1,128], index: 6, kind: input, shape index: {}]
  %s7 = inlined_call_operand.hbm [shape: f32[16,128], index: 7, kind: output, shape index: {}, may-alias: {0,7}]
  %s8 = sld [smem:[#allocation0]]
  $region81: #{fwd.1} parent=0
    _
  %s10 = ssub.s32 1, %s8
  %s11 = scalar_select 0, %s10, %s8
  $region1: #{fwd.1} parent=0
    #allocation4 [shape = 'u8[8192]{0}', space=vmem, size = 0x2000, scoped, tag = 'input window, operand 0, single buffered']
    #allocation5 [shape = 's32[2]{0}', space=sflag, size = 0x8, scoped, tag = 'scoped memory for fwd.1']
    #allocation6 [shape = 's32[2]{0}', space=sflag, size = 0x8, scoped, tag = 'scoped memory for fwd.1']
    #allocation7 [shape = 'u8[131072]{0}', space=vmem, size = 0x20000, scoped, tag = 'input window, operand 3']
    #allocation8 [shape = 's32[2]{0}', space=sflag, size = 0x8, scoped, tag = 'scoped memory for fwd.1']
    #allocation9 [shape = 'u8[131072]{0}', space=vmem, size = 0x20000, scoped, tag = 'input window, operand 5']
    #allocation10 [shape = 'u8[8192]{0}', space=vmem, size = 0x2000, scoped, tag = 'output window, operand 0, single buffered']
    %12 = vsyncpa [#allocation5], 0
    %13 = vsyncpa [#allocation8], 0
    %s14 = scalar_lea.sflag [#allocation8], 1
    %15 = vsyncpa %s14, 0
    %16 = vsyncpa [#allocation6], 0
    loop: start=0, step=1, limit=4
    $region2: #{fwd.1} parent=1 // loop_pre_header
      _
    $region3: #{fwd.1} parent=1 // loop_header
      %s18 = sphi 0, %s22
      %p19 = scmp.ge.s32.totalorder %s18, 4
      %s25 = sphi 0, %s37
      %s26 = sphi 0, %s33
      %s27 = sphi 0, %s25
      %s28 = sphi 0, %s26
      %s29 = sphi 0, %s27
      %s30 = sphi 0, %s28
      %s40 = sphi 0, %s42
      %s43 = sphi 0, %s40
      %s44 = sphi 0, %s43
      %s60 = sphi 0, %s44
      %s64 = sphi 0, %s64
      %s66 = sphi 0, %s64
      %s67 = sphi 0, %s66
      %s81 = sphi 0, %s67
      %s85 = sphi 0, %s85
      %s87 = sphi 0, %s85
      %s88 = sphi 0, %s87
      %s102 = sphi 0, %s88
      %s108 = sphi 0, %s110
      %s111 = sphi 0, %s108
      %s112 = sphi 0, %s111
      %s128 = sphi 0, %s112
      %s134 = sphi 0, %s136
      %s137 = sphi 0, %s134
      %s138 = sphi 0, %s137
      %s154 = sphi 0, %s138
      %s160 = sphi 0, %s162
      %s163 = sphi 0, %s160
      %s164 = sphi 0, %s163
      %s180 = sphi 0, %s164
      %s184 = sphi 0, %s184
      %s186 = sphi 0, %s184
      %s187 = sphi 0, %s186
      %s201 = sphi 0, %s187
      %s207 = sphi 0, %s209
      %s210 = sphi 0, %s207
      %s211 = sphi 0, %s210
      %s227 = sphi 0, %s211
    $region4: #{fwd.1} parent=1 // loop_header_branch
      %21 = sbr.rel (%p19) target = $region8
    $region5: #{fwd.1} parent=1 // loop_body
      %s23 = ssub.s32 %s18, 1
      %s24 = ssub.s32 %s18, 2
      %s31 = sadd.s32 1, %s26
      %p32 = scmp.ge.s32.totalorder %s31, 2
      %s33 = scalar_select %p32, 0, %s31
      %s34 = sadd.s32 1, %s25
      %s35 = scalar_select %p32, %s34, %s25
      %p36 = scmp.ge.s32.totalorder %s35, 1
      %s37 = scalar_select %p36, 0, %s35
      %s38 = ssub.s32 %s25, %s37
      %p39 = scmp.eq.s32.totalorder %s38, 0
      %s41 = sadd.s32 %s40, 1
      %s42 = scalar_select %p39, %s40, %s41
      %p45 = pneg %p39
      %p46 = scmp.eq.s32.totalorder %s18, 1
      %p47 = por %p45, %p46
      %p48 = scmp.ne.s32.totalorder %s40, %s43
      %p49 = scmp.eq.s32.totalorder %s18, 0
      %p50 = por %p48, %p49
      %p51 = scmp.ne.s32.totalorder %s40, %s43
      %p52 = scmp.eq.s32.totalorder %s23, 1
      %p53 = por %p51, %p52
      %p54 = scmp.ne.s32.totalorder %s43, %s44
      %p55 = scmp.eq.s32.totalorder %s23, 0
      %p56 = por %p54, %p55
      %p57 = scmp.ne.s32.totalorder %s43, %s44
      %p58 = scmp.eq.s32.totalorder %s24, 1
      %p59 = por %p57, %p58
      %p61 = scmp.ne.s32.totalorder %s44, %s60
      %p62 = scmp.eq.s32.totalorder %s24, 0
      %p63 = por %p61, %p62
      %s65 = sadd.s32 %s64, 1
      %p68 = scmp.eq.s32.totalorder %s18, 1
      %p69 = scmp.ne.s32.totalorder %s64, %s66
      %p70 = scmp.eq.s32.totalorder %s18, 0
      %p71 = por %p69, %p70
      %p72 = scmp.ne.s32.totalorder %s64, %s66
      %p73 = scmp.eq.s32.totalorder %s23, 1
      %p74 = por %p72, %p73
      %p75 = scmp.ne.s32.totalorder %s66, %s67
      %p76 = scmp.eq.s32.totalorder %s23, 0
      %p77 = por %p75, %p76
      %p78 = scmp.ne.s32.totalorder %s66, %s67
      %p79 = scmp.eq.s32.totalorder %s24, 1
      %p80 = por %p78, %p79
      %p82 = scmp.ne.s32.totalorder %s67, %s81
      %p83 = scmp.eq.s32.totalorder %s24, 0
      %p84 = por %p82, %p83
      %s86 = sadd.s32 %s85, 1
      %p89 = scmp.eq.s32.totalorder %s18, 1
      %p90 = scmp.ne.s32.totalorder %s85, %s87
      %p91 = scmp.eq.s32.totalorder %s18, 0
      %p92 = por %p90, %p91
      %p93 = scmp.ne.s32.totalorder %s85, %s87
      %p94 = scmp.eq.s32.totalorder %s23, 1
      %p95 = por %p93, %p94
      %p96 = scmp.ne.s32.totalorder %s87, %s88
      %p97 = scmp.eq.s32.totalorder %s23, 0
      %p98 = por %p96, %p97
      %p99 = scmp.ne.s32.totalorder %s87, %s88
      %p100 = scmp.eq.s32.totalorder %s24, 1
      %p101 = por %p99, %p100
      %p103 = scmp.ne.s32.totalorder %s88, %s102
      %p104 = scmp.eq.s32.totalorder %s24, 0
      %p105 = por %p103, %p104
      %s106 = ssub.s32 %s26, %s33
      %p107 = scmp.eq.s32.totalorder %s106, 0
      %s109 = sadd.s32 %s108, 1
      %s110 = scalar_select %p107, %s108, %s109
      %p113 = pneg %p107
      %p114 = scmp.eq.s32.totalorder %s18, 1
      %p115 = por %p113, %p114
      %p116 = scmp.ne.s32.totalorder %s108, %s111
      %p117 = scmp.eq.s32.totalorder %s18, 0
      %p118 = por %p116, %p117
      %p119 = scmp.ne.s32.totalorder %s108, %s111
      %p120 = scmp.eq.s32.totalorder %s23, 1
      %p121 = por %p119, %p120
      %p122 = scmp.ne.s32.totalorder %s111, %s112
      %p123 = scmp.eq.s32.totalorder %s23, 0
      %p124 = por %p122, %p123
      %p125 = scmp.ne.s32.totalorder %s111, %s112
      %p126 = scmp.eq.s32.totalorder %s24, 1
      %p127 = por %p125, %p126
      %p129 = scmp.ne.s32.totalorder %s112, %s128
      %p130 = scmp.eq.s32.totalorder %s24, 0
      %p131 = por %p129, %p130
      %s132 = ssub.s32 %s26, %s33
      %p133 = scmp.eq.s32.totalorder %s132, 0
      %s135 = sadd.s32 %s134, 1
      %s136 = scalar_select %p133, %s134, %s135
      %p139 = pneg %p133
      %p140 = scmp.eq.s32.totalorder %s18, 1
      %p141 = por %p139, %p140
      %p142 = scmp.ne.s32.totalorder %s134, %s137
      %p143 = scmp.eq.s32.totalorder %s18, 0
      %p144 = por %p142, %p143
      %p145 = scmp.ne.s32.totalorder %s134, %s137
      %p146 = scmp.eq.s32.totalorder %s23, 1
      %p147 = por %p145, %p146
      %p148 = scmp.ne.s32.totalorder %s137, %s138
      %p149 = scmp.eq.s32.totalorder %s23, 0
      %p150 = por %p148, %p149
      %p151 = scmp.ne.s32.totalorder %s137, %s138
      %p152 = scmp.eq.s32.totalorder %s24, 1
      %p153 = por %p151, %p152
      %p155 = scmp.ne.s32.totalorder %s138, %s154
      %p156 = scmp.eq.s32.totalorder %s24, 0
      %p157 = por %p155, %p156
      %s158 = ssub.s32 %s26, %s33
      %p159 = scmp.eq.s32.totalorder %s158, 0
      %s161 = sadd.s32 %s160, 1
      %s162 = scalar_select %p159, %s160, %s161
      %p165 = pneg %p159
      %p166 = scmp.eq.s32.totalorder %s18, 1
      %p167 = por %p165, %p166
      %p168 = scmp.ne.s32.totalorder %s160, %s163
      %p169 = scmp.eq.s32.totalorder %s18, 0
      %p170 = por %p168, %p169
      %p171 = scmp.ne.s32.totalorder %s160, %s163
      %p172 = scmp.eq.s32.totalorder %s23, 1
      %p173 = por %p171, %p172
      %p174 = scmp.ne.s32.totalorder %s163, %s164
      %p175 = scmp.eq.s32.totalorder %s23, 0
      %p176 = por %p174, %p175
      %p177 = scmp.ne.s32.totalorder %s163, %s164
      %p178 = scmp.eq.s32.totalorder %s24, 1
      %p179 = por %p177, %p178
      %p181 = scmp.ne.s32.totalorder %s164, %s180
      %p182 = scmp.eq.s32.totalorder %s24, 0
      %p183 = por %p181, %p182
      %s185 = sadd.s32 %s184, 1
      %p188 = scmp.eq.s32.totalorder %s18, 1
      %p189 = scmp.ne.s32.totalorder %s184, %s186
      %p190 = scmp.eq.s32.totalorder %s18, 0
      %p191 = por %p189, %p190
      %p192 = scmp.ne.s32.totalorder %s184, %s186
      %p193 = scmp.eq.s32.totalorder %s23, 1
      %p194 = por %p192, %p193
      %p195 = scmp.ne.s32.totalorder %s186, %s187
      %p196 = scmp.eq.s32.totalorder %s23, 0
      %p197 = por %p195, %p196
      %p198 = scmp.ne.s32.totalorder %s186, %s187
      %p199 = scmp.eq.s32.totalorder %s24, 1
      %p200 = por %p198, %p199
      %p202 = scmp.ne.s32.totalorder %s187, %s201
      %p203 = scmp.eq.s32.totalorder %s24, 0
      %p204 = por %p202, %p203
      %s205 = ssub.s32 %s25, %s37
      %p206 = scmp.eq.s32.totalorder %s205, 0
      %s208 = sadd.s32 %s207, 1
      %s209 = scalar_select %p206, %s207, %s208
      %p212 = pneg %p206
      %p213 = scmp.eq.s32.totalorder %s18, 1
      %p214 = por %p212, %p213
      %p215 = scmp.ne.s32.totalorder %s207, %s210
      %p216 = scmp.eq.s32.totalorder %s18, 0
      %p217 = por %p215, %p216
      %p218 = scmp.ne.s32.totalorder %s207, %s210
      %p219 = scmp.eq.s32.totalorder %s23, 1
      %p220 = por %p218, %p219
      %p221 = scmp.ne.s32.totalorder %s210, %s211
      %p222 = scmp.eq.s32.totalorder %s23, 0
      %p223 = por %p221, %p222
      %p224 = scmp.ne.s32.totalorder %s210, %s211
      %p225 = scmp.eq.s32.totalorder %s24, 1
      %p226 = por %p224, %p225
      %p228 = scmp.ne.s32.totalorder %s211, %s227
      %p229 = scmp.eq.s32.totalorder %s24, 0
      %p230 = por %p228, %p229
      %p231 = scmp.le.s32.totalorder 1, %s18
      %p232 = scmp.lt.s32.totalorder %s18, 3
      %p233 = pnand %p231, %p232
      %p234 = pneg %p233
      // Predicated region
      $region9: #{fwd.1} parent=5 // pred_check
        _
      $region10: #{fwd.1} parent=5 // pred_check_branch
        %236 = sbr.rel (%p233) target = $region12
      $region11: #{fwd.1} parent=5 // pred_region
        %s237 = ssub.s32 %s18, 1
        // Predicated region
        $region13: #{fwd.1} parent=11 // pred_check
          %p238 = pneg %p56
        $region14: #{fwd.1} parent=11 // pred_check_branch
          %240 = sbr.rel (%p238) target = $region16
        $region15: #{fwd.1} parent=11 // pred_region
          %s241 = smul.u32 2, %s27
          %s243 = ssub.s32 256, 256
          %244 = vsyncadd [#allocation5], %s243
          %s245 = smul.addr %s241, 128
          %s246 = scalar_lea.hbm %s0, %s245
          %s247 = sshll.u32 [#allocation4], 4
          %s248 = int_to_ptr.vmem [resolvable:$true] %s247
          %253 = dma.hbm_to_vmem [thread:$0]  %s246, 256, %s248, [#allocation5], 128, 128, 8
        $region16: #{fwd.1} parent=11 // pred_fallthru
          _
        // Predicated region
        $region17: #{fwd.1} parent=11 // pred_check
          %p254 = pneg %p77
        $region18: #{fwd.1} parent=11 // pred_check_branch
          %256 = sbr.rel (%p254) target = $region20
        $region19: #{fwd.1} parent=11 // pred_region
          _
        $region20: #{fwd.1} parent=11 // pred_fallthru
          _
        // Predicated region
        $region21: #{fwd.1} parent=11 // pred_check
          %p257 = pneg %p98
        $region22: #{fwd.1} parent=11 // pred_check_branch
          %259 = sbr.rel (%p257) target = $region24
        $region23: #{fwd.1} parent=11 // pred_region
          _
        $region24: #{fwd.1} parent=11 // pred_fallthru
          _
        // Predicated region
        $region25: #{fwd.1} parent=11 // pred_check
          %p260 = pneg %p197
        $region26: #{fwd.1} parent=11 // pred_check_branch
          %262 = sbr.rel (%p260) target = $region28
        $region27: #{fwd.1} parent=11 // pred_region
          _
        $region28: #{fwd.1} parent=11 // pred_fallthru
          _
      $region12: #{fwd.1} parent=5 // pred_fallthru
        _
      %p263 = scmp.lt.s32.totalorder %s18, 2
      // Predicated region
      $region29: #{fwd.1} parent=5 // pred_check
        %p264 = pneg %p263
      $region30: #{fwd.1} parent=5 // pred_check_branch
        %266 = sbr.rel (%p264) target = $region32
      $region31: #{fwd.1} parent=5 // pred_region
        // Predicated region
        $region33: #{fwd.1} parent=31 // pred_check
          %p267 = pneg %p118
        $region34: #{fwd.1} parent=31 // pred_check_branch
          %269 = sbr.rel (%p267) target = $region36
        $region35: #{fwd.1} parent=31 // pred_region
          %s270 = sand.u32 %s18, 1
          %s271 = scalar_lea.sflag [#allocation8], %s270
          %s272 = sand.u32 %s108, 1
          %s273 = smul.addr %s272, 128
          %s274 = scalar_lea.vmem [#allocation7], %s273
          %s275 = smul.u32 2, %s26
          %s277 = ssub.s32 2048, 2048
          %278 = vsyncadd %s271, %s277
          %s279 = smul.addr %s275, 64
          %s280 = scalar_lea.hbm %s3, %s279
          %s281 = sshll.u32 %s274, 4
          %s282 = int_to_ptr.vmem [resolvable:$true] %s281
          %287 = dma.hbm_to_vmem [thread:$0]  %s280, 2048, %s282, %s271, 256, 128, 8
        $region36: #{fwd.1} parent=31 // pred_fallthru
          _
        // Predicated region
        $region37: #{fwd.1} parent=31 // pred_check
          %p288 = pneg %p144
        $region38: #{fwd.1} parent=31 // pred_check_branch
          %290 = sbr.rel (%p288) target = $region40
        $region39: #{fwd.1} parent=31 // pred_region
          %s291 = smul.u32 2, %s26
          %p292 = scmp.lt.s32.totalorder %s291, 3
          %s293 = scalar_select %p292, %s291, 3
          %s294 = scalar_lea.vmem %s4, %s293
          %s295 = smul.u32 2, %s26
        $region40: #{fwd.1} parent=31 // pred_fallthru
          _
        // Predicated region
        $region41: #{fwd.1} parent=31 // pred_check
          %p296 = pneg %p170
        $region42: #{fwd.1} parent=31 // pred_check_branch
          %298 = sbr.rel (%p296) target = $region44
        $region43: #{fwd.1} parent=31 // pred_region
          %s299 = sand.u32 %s18, 1
          %s300 = scalar_lea.sflag [#allocation8], %s299
          %s301 = sand.u32 %s160, 1
          %s302 = smul.addr %s301, 128
          %s303 = scalar_lea.vmem [#allocation9], %s302
          %s304 = smul.u32 32, %s26
          %s306 = ssub.s32 2048, 2048
          %307 = vsyncadd %s300, %s306
          %s308 = smul.addr %s304, 64
          %s309 = scalar_lea.hbm %s5, %s308
          %s310 = sshll.u32 %s303, 4
          %s311 = int_to_ptr.vmem [resolvable:$true] %s310
          %316 = dma.hbm_to_vmem [thread:$0]  %s309, 2048, %s311, %s300, 64, 64, 4
        $region44: #{fwd.1} parent=31 // pred_fallthru
          _
      $region32: #{fwd.1} parent=5 // pred_fallthru
        _
      %p317 = scmp.le.s32.totalorder 1, %s18
      %p318 = scmp.lt.s32.totalorder %s18, 3
      %p319 = pnand %p317, %p318
      %p320 = pneg %p319
      // Predicated region
      $region45: #{fwd.1} parent=5 // pred_check
        _
      $region46: #{fwd.1} parent=5 // pred_check_branch
        %322 = sbr.rel (%p319) target = $region48
      $region47: #{fwd.1} parent=5 // pred_region
        %s323 = ssub.s32 %s18, 1
        // Predicated region
        $region49: #{fwd.1} parent=47 // pred_check
          %p324 = pneg %p56
        $region50: #{fwd.1} parent=47 // pred_check_branch
          %326 = sbr.rel (%p324) target = $region52
        $region51: #{fwd.1} parent=47 // pred_region
          %327 = dma.done [#allocation5], 256
        $region52: #{fwd.1} parent=47 // pred_fallthru
          _
        %s328 = sand.u32 %s23, 1
        %s329 = scalar_lea.sflag [#allocation8], %s328
        %s330 = sand.u32 %s111, 1
        %s331 = smul.addr %s330, 128
        %s332 = scalar_lea.vmem [#allocation7], %s331
        // Predicated region
        $region53: #{fwd.1} parent=47 // pred_check
          %p333 = pneg %p124
        $region54: #{fwd.1} parent=47 // pred_check_branch
          %335 = sbr.rel (%p333) target = $region56
        $region55: #{fwd.1} parent=47 // pred_region
          %336 = dma.done %s329, 2048
        $region56: #{fwd.1} parent=47 // pred_fallthru
          _
        %s337 = sand.u32 %s23, 1
        %s338 = scalar_lea.sflag [#allocation8], %s337
        %s339 = sand.u32 %s163, 1
        %s340 = smul.addr %s339, 128
        %s341 = scalar_lea.vmem [#allocation9], %s340
        // Predicated region
        $region57: #{fwd.1} parent=47 // pred_check
          %p342 = pneg %p176
        $region58: #{fwd.1} parent=47 // pred_check_branch
          %344 = sbr.rel (%p342) target = $region60
        $region59: #{fwd.1} parent=47 // pred_region
          %345 = dma.done %s338, 2048
        $region60: #{fwd.1} parent=47 // pred_fallthru
          _
        %p346 = pneg %p56
        %p347 = pneg %p53
        %p348 = pneg %p77
        %p349 = pneg %p74
        %p350 = pneg %p98
        %p351 = pneg %p95
        %s352 = sand.u32 %s23, 1
        %s353 = scalar_lea.sflag [#allocation8], %s352
        %s354 = sand.u32 %s111, 1
        %s355 = smul.addr %s354, 128
        %s356 = scalar_lea.vmem [#allocation7], %s355
        %p357 = pneg %p124
        %p358 = pneg %p121
        %s359 = smul.u32 2, %s28
        %p360 = scmp.lt.s32.totalorder %s359, 3
        %s361 = scalar_select %p360, %s359, 3
        %s362 = scalar_lea.vmem %s4, %s361
        %p363 = pneg %p150
        %p364 = pneg %p147
        %s365 = sand.u32 %s23, 1
        %s366 = scalar_lea.sflag [#allocation8], %s365
        %s367 = sand.u32 %s163, 1
        %s368 = smul.addr %s367, 128
        %s369 = scalar_lea.vmem [#allocation9], %s368
        %p370 = pneg %p176
        %p371 = pneg %p173
        %p372 = pneg %p197
        %p373 = pneg %p194
        %p374 = pneg %p223
        %p375 = pneg %p220
        %s376 = smul.u32 2, %s27
        %s377 = smul.u32 2, %s28
        %s378 = smul.u32 2, %s28
        %p379 = scmp.lt.s32.totalorder %s378, 3
        %s380 = scalar_select %p379, %s378, 3
        %s381 = scalar_lea.vmem %s4, %s380
        %s382 = smul.u32 2, %s28
        %s383 = smul.u32 32, %s28
        %s384 = smul.u32 2, %s27
        %p386 = scmp.eq.s32.totalorder %s28, 0
        // Predicated region
        $region61: #{fwd.1} parent=47 // pred_check
          %p387 = pneg %p386
        $region62: #{fwd.1} parent=47 // pred_check_branch
          %389 = sbr.rel (%p387) target = $region64
        $region63: #{fwd.1} parent=47 // pred_region
          %v390 = vld [vmem:[#allocation4] sm:$0xff]
          %v391 = vld [vmem:[#allocation4 + $0x8] sm:$0xff]
          %392 = vadd.xlane.f32.xlu0 %v390
          %v393 = vpop.xlane.xlu0 %392
          %394 = vadd.xlane.f32.xlu0 %v391
          %v395 = vpop.xlane.xlu0 %394
          %v396 = vrcp.pop 128.0
          %v397 = vmul.f32 %v393, %v396
          %v398 = vmul.f32 %v395, %v396
          %v399 = vsub.f32 %v390, %v397
          %v400 = vsub.f32 %v391, %v398
          %v401 = vmul.f32 %v399, %v399
          %v402 = vmul.f32 %v400, %v400
          %403 = vadd.xlane.f32.xlu0 %v401
          %v404 = vpop.xlane.xlu0 %403
          %405 = vadd.xlane.f32.xlu0 %v402
          %v406 = vpop.xlane.xlu0 %405
          %v407 = vmul.f32 %v404, 0.007874016
          %v408 = vmul.f32 %v406, 0.007874016
          %v409 = vrsqrt.pop %v407
          %v410 = vmul.f32 %v407, %v409
          %vm411 = vcmp.eq.f32.partialorder %v407, inf
          %v412 = vsel %vm411, %v407, %v410
          %vm413 = vcmp.eq.f32.partialorder %v407, 0.0
          %v414 = vand.u32 %v407, 2147483648
          %v415 = vsel %vm413, %v414, %v412
          %v416 = vrsqrt.pop %v408
          %v417 = vmul.f32 %v408, %v416
          %vm418 = vcmp.eq.f32.partialorder %v408, inf
          %v419 = vsel %vm418, %v408, %v417
          %vm420 = vcmp.eq.f32.partialorder %v408, 0.0
          %v421 = vand.u32 %v408, 2147483648
          %v422 = vsel %vm420, %v421, %v419
          %v423 = vadd.f32 %v415, 1e-06
          %v424 = vadd.f32 %v422, 1e-06
          %v425 = vrcp.pop %v423
          %v426 = vrcp.pop %v424
          %v427 = vld [vmem:[%s1] sm:$0x1]
          %v428 = vmul.f32 %v399, %v425
          %v429 = vmul.f32 %v400, %v426
          %v431 = vlaneseq
          %v432 = vshrl.u32 %v431, 7
          %v433 = vsub.s32 0, %v432
          %v434 = vrot.slane %v427, %v433
          %v436 = vmul.f32 %v434, %v428
          %v437 = vmul.f32 %v434, %v429
          %v438 = vld [vmem:[%s2] sm:$0x1]
          %v440 = vlaneseq
          %v441 = vshrl.u32 %v440, 7
          %v442 = vsub.s32 0, %v441
          %v443 = vrot.slane %v438, %v442
          %v445 = vadd.f32 %v436, %v443
          %v446 = vadd.f32 %v437, %v443
          %v447 = vpack.c.bf16 %v446, %v445
          %v449 = vunpack.c.l.b16 %v447
          %v450 = vunpack.c.h.b16 %v447
          %v451 = vpack.c.b16 %v449, %v449
          %v452 = vpack.c.b16 %v450, %v450
          %455 = vst [vmem:[#allocation3] sm:$0xf] %v451
          %456 = vst [vmem:[#allocation3 + $0x4] sm:$0xf] %v452
          %457 = vst [vmem:[#allocation2] sm:$0xff] 0.0
          %458 = vst [vmem:[#allocation2 + $0x8] sm:$0xff] 0.0
        $region64: #{fwd.1} parent=47 // pred_fallthru
          _
        %v459 = vld [vmem:[#allocation3] sm:$0xf]
        %v460 = vld [vmem:[#allocation3 + $0x4] sm:$0xf]
        %v461 = vld [vmem:[%s332] sm:$0xff]
        %v462 = vld [vmem:[%s332 + $0x8] sm:$0xff]
        %v463 = vld [vmem:[%s332 + $0x10] sm:$0xff]
        %v464 = vld [vmem:[%s332 + $0x18] sm:$0xff]
        %v465 = vld [vmem:[%s332 + $0x20] sm:$0xff]
        %v466 = vld [vmem:[%s332 + $0x28] sm:$0xff]
        %v467 = vld [vmem:[%s332 + $0x30] sm:$0xff]
        %v468 = vld [vmem:[%s332 + $0x38] sm:$0xff]
        %v469 = vld [vmem:[%s332 + $0x40] sm:$0xff]
        %v470 = vld [vmem:[%s332 + $0x48] sm:$0xff]
        %v471 = vld [vmem:[%s332 + $0x50] sm:$0xff]
        %v472 = vld [vmem:[%s332 + $0x58] sm:$0xff]
        %v473 = vld [vmem:[%s332 + $0x60] sm:$0xff]
        %v474 = vld [vmem:[%s332 + $0x68] sm:$0xff]
        %v475 = vld [vmem:[%s332 + $0x70] sm:$0xff]
        %v476 = vld [vmem:[%s332 + $0x78] sm:$0xff]
        %v477 = vld [vmem:[%s381] sm:$0x3]
        %v479 = vlaneseq
        %v480 = vshrl.u32 %v479, 7
        %v481 = vsub.s32 0, %v480
        %v482 = vrot.slane %v477, %v481
        %v483 = vlaneseq
        %v484 = vshrl.u32 %v483, 7
        %v485 = vsub.s32 1, %v484
        %v486 = vrot.slane %v477, %v485
        %v491 = vunpack.c.l.b16 %v459
        %v492 = vunpack.c.l.b16 %v460
        %v493 = vpack.c.b16 %v492, %v491
        %v511 = vunpack.c.l.b16 %v461
        %v512 = vunpack.c.h.b16 %v461
        %v513 = vunpack.c.l.b16 %v462
        %v514 = vunpack.c.h.b16 %v462
        %v515 = vunpack.c.l.b16 %v463
        %v516 = vunpack.c.h.b16 %v463
        %v517 = vunpack.c.l.b16 %v464
        %v518 = vunpack.c.h.b16 %v464
        %v519 = vunpack.c.l.b16 %v465
        %v520 = vunpack.c.h.b16 %v465
        %v521 = vunpack.c.l.b16 %v466
        %v522 = vunpack.c.h.b16 %v466
        %v523 = vunpack.c.l.b16 %v467
        %v524 = vunpack.c.h.b16 %v467
        %v525 = vunpack.c.l.b16 %v468
        %v526 = vunpack.c.h.b16 %v468
        %v527 = vunpack.c.l.b16 %v469
        %v528 = vunpack.c.h.b16 %v469
        %v529 = vunpack.c.l.b16 %v470
        %v530 = vunpack.c.h.b16 %v470
        %v531 = vunpack.c.l.b16 %v471
        %v532 = vunpack.c.h.b16 %v471
        %v533 = vunpack.c.l.b16 %v472
        %v534 = vunpack.c.h.b16 %v472
        %v535 = vunpack.c.l.b16 %v473
        %v536 = vunpack.c.h.b16 %v473
        %v537 = vunpack.c.l.b16 %v474
        %v538 = vunpack.c.h.b16 %v474
        %v539 = vunpack.c.l.b16 %v475
        %v540 = vunpack.c.h.b16 %v475
        %v541 = vunpack.c.l.b16 %v476
        %v542 = vunpack.c.h.b16 %v476
        %v543 = vpack.c.b16 %v513, %v511
        %v544 = vpack.c.b16 %v514, %v512
        %v545 = vpack.c.b16 %v517, %v515
        %v546 = vpack.c.b16 %v518, %v516
        %v547 = vpack.c.b16 %v521, %v519
        %v548 = vpack.c.b16 %v522, %v520
        %v549 = vpack.c.b16 %v525, %v523
        %v550 = vpack.c.b16 %v526, %v524
        %v551 = vpack.c.b16 %v529, %v527
        %v552 = vpack.c.b16 %v530, %v528
        %v553 = vpack.c.b16 %v533, %v531
        %v554 = vpack.c.b16 %v534, %v532
        %v555 = vpack.c.b16 %v537, %v535
        %v556 = vpack.c.b16 %v538, %v536
        %v557 = vpack.c.b16 %v541, %v539
        %v558 = vpack.c.b16 %v542, %v540
        %575 = vmatprep.subr.bf16.mxu0 %v558
        %576 = vmatpush1.bf16.msra.mxu0 %v557
        %577 = vmatprep.subr.bf16.mxu0 %v556
        %578 = vmatpush1.bf16.msra.mxu0 %v555
        %579 = vmatprep.subr.bf16.mxu0 %v554
        %580 = vmatpush1.bf16.msra.mxu0 %v553
        %581 = vmatprep.subr.bf16.mxu0 %v552
        %582 = vmatpush1.bf16.msra.mxu0 %v551
        %583 = vmatprep.subr.bf16.mxu0 %v550
        %584 = vmatpush1.bf16.msra.mxu0 %v549
        %585 = vmatprep.subr.bf16.mxu0 %v548
        %586 = vmatpush1.bf16.msra.mxu0 %v547
        %587 = vmatprep.subr.bf16.mxu0 %v546
        %588 = vmatpush1.bf16.msra.mxu0 %v545
        %589 = vmatprep.subr.bf16.mxu0 %v544
        %590 = vmatpush1.bf16.msra.mxu0 %v543
        %591 = vmatprep.subr.bf16.mxu0 0
        %592 = vmatpush2.bf16.msra.mxu0 0
        %593 = vmatprep.subr.bf16.mxu0 0
        %594 = vmatpush2.bf16.msra.mxu0 0
        %595 = vmatprep.subr.bf16.mxu0 0
        %596 = vmatpush2.bf16.msra.mxu0 0
        %597 = vmatprep.subr.bf16.mxu0 0
        %598 = vmatpush2.bf16.msra.mxu0 0
        %599 = vmatprep.subr.bf16.mxu0 0
        %600 = vmatpush2.bf16.msra.mxu0 0
        %601 = vmatprep.subr.bf16.mxu0 0
        %602 = vmatpush2.bf16.msra.mxu0 0
        %603 = vmatprep.subr.bf16.mxu0 0
        %604 = vmatpush2.bf16.msra.mxu0 0
        %605 = vmatprep.subr.bf16.mxu0 0
        %606 = vmatpush2.bf16.msra.mxu0 0
        %607 = vmatprep.mubr.bf16.mxu0 0
        %608 = vmatmul.mubr.bf16.gmra.mxu0 %v493
        %v609 = vpop.f32.mrf.mxu0
        %v610 = vadd.f32 %v482, %v609
        %v611 = vpop.f32.mrf.mxu0
        %v612 = vadd.f32 %v486, %v611
        %v613 = vpop.f32.mrf.mxu0
        %v614 = vadd.f32 %v482, %v613
        %v615 = vpop.f32.mrf.mxu0
        %v616 = vadd.f32 %v486, %v615
        %617 = vdwg.mxu0
        %v618 = vmax.f32 %v610, 0.0
        %v619 = vmax.f32 %v612, 0.0
        %v620 = vmax.f32 %v614, 0.0
        %v621 = vmax.f32 %v616, 0.0
        %v622 = vld [vmem:[#allocation2] sm:$0xff]
        %v623 = vld [vmem:[#allocation2 + $0x8] sm:$0xff]
        %v624 = vpack.c.bf16 %v620, %v618
        %v625 = vpack.c.bf16 %v621, %v619
        %v626 = vld [vmem:[%s341] sm:$0xf]
        %v627 = vld [vmem:[%s341 + $0x4] sm:$0xf]
        %v628 = vld [vmem:[%s341 + $0x8] sm:$0xf]
        %v629 = vld [vmem:[%s341 + $0xc] sm:$0xf]
        %v630 = vld [vmem:[%s341 + $0x10] sm:$0xf]
        %v631 = vld [vmem:[%s341 + $0x14] sm:$0xf]
        %v632 = vld [vmem:[%s341 + $0x18] sm:$0xf]
        %v633 = vld [vmem:[%s341 + $0x1c] sm:$0xf]
        %v634 = vld [vmem:[%s341 + $0x20] sm:$0xf]
        %v635 = vld [vmem:[%s341 + $0x24] sm:$0xf]
        %v636 = vld [vmem:[%s341 + $0x28] sm:$0xf]
        %v637 = vld [vmem:[%s341 + $0x2c] sm:$0xf]
        %v638 = vld [vmem:[%s341 + $0x30] sm:$0xf]
        %v639 = vld [vmem:[%s341 + $0x34] sm:$0xf]
        %v640 = vld [vmem:[%s341 + $0x38] sm:$0xf]
        %v641 = vld [vmem:[%s341 + $0x3c] sm:$0xf]
        %v642 = vld [vmem:[%s341 + $0x40] sm:$0xf]
        %v643 = vld [vmem:[%s341 + $0x44] sm:$0xf]
        %v644 = vld [vmem:[%s341 + $0x48] sm:$0xf]
        %v645 = vld [vmem:[%s341 + $0x4c] sm:$0xf]
        %v646 = vld [vmem:[%s341 + $0x50] sm:$0xf]
        %v647 = vld [vmem:[%s341 + $0x54] sm:$0xf]
        %v648 = vld [vmem:[%s341 + $0x58] sm:$0xf]
        %v649 = vld [vmem:[%s341 + $0x5c] sm:$0xf]
        %v650 = vld [vmem:[%s341 + $0x60] sm:$0xf]
        %v651 = vld [vmem:[%s341 + $0x64] sm:$0xf]
        %v652 = vld [vmem:[%s341 + $0x68] sm:$0xf]
        %v653 = vld [vmem:[%s341 + $0x6c] sm:$0xf]
        %v654 = vld [vmem:[%s341 + $0x70] sm:$0xf]
        %v655 = vld [vmem:[%s341 + $0x74] sm:$0xf]
        %v656 = vld [vmem:[%s341 + $0x78] sm:$0xf]
        %v657 = vld [vmem:[%s341 + $0x7c] sm:$0xf]
        %v690 = vunpack.c.l.b16 %v626
        %v691 = vunpack.c.l.b16 %v627
        %v692 = vunpack.c.l.b16 %v628
        %v693 = vunpack.c.l.b16 %v629
        %v694 = vunpack.c.l.b16 %v630
        %v695 = vunpack.c.l.b16 %v631
        %v696 = vunpack.c.l.b16 %v632
        %v697 = vunpack.c.l.b16 %v633
        %v698 = vunpack.c.l.b16 %v634
        %v699 = vunpack.c.l.b16 %v635
        %v700 = vunpack.c.l.b16 %v636
        %v701 = vunpack.c.l.b16 %v637
        %v702 = vunpack.c.l.b16 %v638
        %v703 = vunpack.c.l.b16 %v639
        %v704 = vunpack.c.l.b16 %v640
        %v705 = vunpack.c.l.b16 %v641
        %v706 = vunpack.c.l.b16 %v642
        %v707 = vunpack.c.l.b16 %v643
        %v708 = vunpack.c.l.b16 %v644
        %v709 = vunpack.c.l.b16 %v645
        %v710 = vunpack.c.l.b16 %v646
        %v711 = vunpack.c.l.b16 %v647
        %v712 = vunpack.c.l.b16 %v648
        %v713 = vunpack.c.l.b16 %v649
        %v714 = vunpack.c.l.b16 %v650
        %v715 = vunpack.c.l.b16 %v651
        %v716 = vunpack.c.l.b16 %v652
        %v717 = vunpack.c.l.b16 %v653
        %v718 = vunpack.c.l.b16 %v654
        %v719 = vunpack.c.l.b16 %v655
        %v720 = vunpack.c.l.b16 %v656
        %v721 = vunpack.c.l.b16 %v657
        %v722 = vpack.c.b16 %v691, %v690
        %v723 = vpack.c.b16 %v693, %v692
        %v724 = vpack.c.b16 %v695, %v694
        %v725 = vpack.c.b16 %v697, %v696
        %v726 = vpack.c.b16 %v699, %v698
        %v727 = vpack.c.b16 %v701, %v700
        %v728 = vpack.c.b16 %v703, %v702
        %v729 = vpack.c.b16 %v705, %v704
        %v730 = vpack.c.b16 %v707, %v706
        %v731 = vpack.c.b16 %v709, %v708
        %v732 = vpack.c.b16 %v711, %v710
        %v733 = vpack.c.b16 %v713, %v712
        %v734 = vpack.c.b16 %v715, %v714
        %v735 = vpack.c.b16 %v717, %v716
        %v736 = vpack.c.b16 %v719, %v718
        %v737 = vpack.c.b16 %v721, %v720
        %754 = vmatprep.subr.bf16.mxu0 0
        %755 = vmatpush1.bf16.msra.mxu0 %v729
        %756 = vmatprep.subr.bf16.mxu0 0
        %757 = vmatpush1.bf16.msra.mxu0 %v728
        %758 = vmatprep.subr.bf16.mxu0 0
        %759 = vmatpush1.bf16.msra.mxu0 %v727
        %760 = vmatprep.subr.bf16.mxu0 0
        %761 = vmatpush1.bf16.msra.mxu0 %v726
        %762 = vmatprep.subr.bf16.mxu0 0
        %763 = vmatpush1.bf16.msra.mxu0 %v725
        %764 = vmatprep.subr.bf16.mxu0 0
        %765 = vmatpush1.bf16.msra.mxu0 %v724
        %766 = vmatprep.subr.bf16.mxu0 0
        %767 = vmatpush1.bf16.msra.mxu0 %v723
        %768 = vmatprep.subr.bf16.mxu0 0
        %769 = vmatpush1.bf16.msra.mxu0 %v722
        %770 = vmatprep.subr.bf16.mxu0 0
        %771 = vmatpush2.bf16.msra.mxu0 %v737
        %772 = vmatprep.subr.bf16.mxu0 0
        %773 = vmatpush2.bf16.msra.mxu0 %v736
        %774 = vmatprep.subr.bf16.mxu0 0
        %775 = vmatpush2.bf16.msra.mxu0 %v735
        %776 = vmatprep.subr.bf16.mxu0 0
        %777 = vmatpush2.bf16.msra.mxu0 %v734
        %778 = vmatprep.subr.bf16.mxu0 0
        %779 = vmatpush2.bf16.msra.mxu0 %v733
        %780 = vmatprep.subr.bf16.mxu0 0
        %781 = vmatpush2.bf16.msra.mxu0 %v732
        %782 = vmatprep.subr.bf16.mxu0 0
        %783 = vmatpush2.bf16.msra.mxu0 %v731
        %784 = vmatprep.subr.bf16.mxu0 0
        %785 = vmatpush2.bf16.msra.mxu0 %v730
        %786 = vmatprep.mubr.bf16.mxu0 %v625
        %787 = vmatmul.mubr.bf16.gmra.mxu0 %v624
        %v788 = vpop.f32.mrf.mxu0
        %v789 = vadd.f32 0.0, %v788
        %v790 = vpop.f32.mrf.mxu0
        %v791 = vpop.f32.mrf.mxu0
        %v792 = vadd.f32 0.0, %v791
        %v793 = vpop.f32.mrf.mxu0
        %794 = vdwg.mxu0
        %v795 = vadd.f32 %v622, %v789
        %v796 = vadd.f32 %v623, %v792
        %797 = vst [vmem:[#allocation2] sm:$0xff] %v795
        %798 = vst [vmem:[#allocation2 + $0x8] sm:$0xff] %v796
        %p799 = scmp.eq.s32.totalorder %s28, 1
        // Predicated region
        $region65: #{fwd.1} parent=47 // pred_check
          %p800 = pneg %p799
        $region66: #{fwd.1} parent=47 // pred_check_branch
          %802 = sbr.rel (%p800) target = $region68
        $region67: #{fwd.1} parent=47 // pred_region
          %v803 = vld [vmem:[#allocation4] sm:$0xff]
          %v804 = vld [vmem:[#allocation4 + $0x8] sm:$0xff]
          %v805 = vld [vmem:[#allocation2] sm:$0xff]
          %v806 = vld [vmem:[#allocation2 + $0x8] sm:$0xff]
          %v807 = vadd.f32 %v803, %v805
          %v808 = vadd.f32 %v804, %v806
          %v809 = vld [vmem:[%s6] sm:$0x1]
          %v811 = vlaneseq
          %v812 = vshrl.u32 %v811, 7
          %v813 = vsub.s32 0, %v812
          %v814 = vrot.slane %v809, %v813
          %v816 = vadd.f32 %v807, %v814
          %v817 = vadd.f32 %v808, %v814
          %818 = vst [vmem:[#allocation10] sm:$0xff] %v816
          %819 = vst [vmem:[#allocation10 + $0x8] sm:$0xff] %v817
        $region68: #{fwd.1} parent=47 // pred_fallthru
          _
        // Predicated region
        $region69: #{fwd.1} parent=47 // pred_check
          %p820 = pneg %p220
        $region70: #{fwd.1} parent=47 // pred_check_branch
          %822 = sbr.rel (%p820) target = $region72
        $region71: #{fwd.1} parent=47 // pred_region
          %s823 = smul.u32 2, %s27
          %s825 = ssub.s32 256, 256
          %826 = vsyncadd [#allocation6], %s825
          %s827 = smul.addr %s823, 128
          %s828 = scalar_lea.hbm %s7, %s827
          %s829 = sshll.u32 [#allocation10], 4
          %s830 = int_to_ptr.vmem [resolvable:$true] %s829
          %835 = dma.vmem_to_hbm [thread:$0]  %s830, 256, %s828, [#allocation6], 128, 128, 8
        $region72: #{fwd.1} parent=47 // pred_fallthru
          _
        // Predicated region
        $region73: #{fwd.1} parent=47 // pred_check
          %p836 = pneg %p220
        $region74: #{fwd.1} parent=47 // pred_check_branch
          %838 = sbr.rel (%p836) target = $region76
        $region75: #{fwd.1} parent=47 // pred_region
          %839 = dma.done [#allocation6], 256
        $region76: #{fwd.1} parent=47 // pred_fallthru
          _
      $region48: #{fwd.1} parent=5 // pred_fallthru
        _
      %p840 = scmp.le.s32.totalorder 2, %s18
      // Predicated region
      $region77: #{fwd.1} parent=5 // pred_check
        %p841 = pneg %p840
      $region78: #{fwd.1} parent=5 // pred_check_branch
        %843 = sbr.rel (%p841) target = $region80
      $region79: #{fwd.1} parent=5 // pred_region
        %s844 = ssub.s32 %s18, 2
      $region80: #{fwd.1} parent=5 // pred_fallthru
        _
    $region6: #{fwd.1} parent=1 // loop_footer
      %s22 = sadd.s32 1, %s18
    $region7: #{fwd.1} parent=1 // loop_footer_branch
      %17 = sbr.rel target = $region3
    $region8: #{fwd.1} parent=1 // loop_exit
      _
    %845 = vsyncpa [#allocation5], 1
    %s846 = scalar_lea.sflag [#allocation5], 1
    %847 = vsyncpa %s846, 1
    %848 = vsyncpa [#allocation8], 1
    %s849 = scalar_lea.sflag [#allocation8], 1
    %850 = vsyncpa %s849, 1
    %851 = vsyncpa [#allocation6], 1
    %s852 = scalar_lea.sflag [#allocation6], 1
    %853 = vsyncpa %s852, 1

</llo_original>
